<compile_context>
chip_gen: v7x
topology: tpu7x:2x2x1
jax: 0.10.0
libtpu: 0.0.40
codegen_flags: <defaults>
</compile_context>

<pallas_src>
import functools

import jax
import jax.numpy as jnp
from jax.experimental import pallas as pl
from jax.experimental.pallas import tpu as pltpu


def _round_up(x: int, m: int) -> int:
    return (x + m - 1) // m * m


def mlp_kernel(x_ref, w1_ref, b1_ref, w2_ref, b2_ref, w3_ref, b3_ref, o_ref):
    # x arrives in f32 straight from HBM; cast to bf16 on the VPU so the MXU runs
    # native bf16 passes with f32 accumulation.
    x = x_ref[...].astype(jnp.bfloat16)

    # Hoist bias loads (f32 row vectors, broadcast over the batch tile).
    b1 = b1_ref[...]
    b2 = b2_ref[...]
    b3 = b3_ref[...]

    # l1: Linear(input -> hidden_pad) + ReLU.  f32 epilogue (native on v5e VPU).
    h1 = jnp.dot(x, w1_ref[...], preferred_element_type=jnp.float32) + b1
    h1 = jnp.maximum(h1, 0.0).astype(jnp.bfloat16)

    # l2: Linear(hidden_pad -> hidden_pad) + ReLU.
    h2 = jnp.dot(h1, w2_ref[...], preferred_element_type=jnp.float32) + b2
    h2 = jnp.maximum(h2, 0.0).astype(jnp.bfloat16)

    # l3: Linear(hidden_pad -> num_classes) logits in f32, true class width so the
    # HBM writeback stream stays tiny.
    o_ref[...] = jnp.dot(h2, w3_ref[...], preferred_element_type=jnp.float32) + b3


def _choose_batch_tiling(B: int, tb_max: int = 512):
    """Pick (B_pad, TB, nb): <=7 rows of padding, >=2 tiles when batch allows (v7x)."""
    if B <= 8:
        return B, B, 1                        # single full-dim block, no row padding
    B8 = _round_up(B, 8)
    nb = max(2, pl.cdiv(B8, tb_max))          # >=2 tiles so both v7x TCs get work
    TB = _round_up(pl.cdiv(B8, nb), 8)
    nb = pl.cdiv(B8, TB)
    return TB * nb, TB, nb


def neural_net_forward(x, prepped, num_classes, *, tb_max=512):
    """x: [B, input_size] float32.  prepped: dict of bf16 weights ([in, out], hidden
    dim lane-padded) and f32 biases ([1, out]).  Returns [B, num_classes] f32."""
    w1, b1 = prepped["w1"], prepped["b1"]
    w2, b2 = prepped["w2"], prepped["b2"]
    w3, b3 = prepped["w3"], prepped["b3"]

    B, IN = x.shape
    assert w1.shape[0] == IN, "w1 must keep the true input width (no lane padding)"
    H_pad = w1.shape[1]
    C = w3.shape[1]
    assert C == num_classes

    B_pad, TB, nb = _choose_batch_tiling(B, tb_max)
    if B_pad != B:
        x = jnp.pad(x, ((0, B_pad - B), (0, 0)))   # only the (<=7*nb) dead rows

    cost = pl.CostEstimate(
        flops=2 * B_pad * (IN * H_pad + H_pad * H_pad + H_pad * C),
        transcendentals=0,
        bytes_accessed=(
            B_pad * IN * 4                                  # x (f32 in)
            + (w1.size + w2.size + w3.size) * 2             # bf16 weights
            + (b1.size + b2.size + b3.size) * 4             # f32 biases
            + B_pad * C * 4                                  # f32 logits out
        ),
    )

    out = pl.pallas_call(
        mlp_kernel,
        out_shape=jax.ShapeDtypeStruct((B_pad, C), jnp.float32),
        grid=(nb,),
        in_specs=[
            pl.BlockSpec((TB, IN), lambda i: (i, 0)),        # x tile (pipelined, f32)
            pl.BlockSpec((IN, H_pad), lambda i: (0, 0)),     # w1 (VMEM resident, bf16)
            pl.BlockSpec((1, H_pad), lambda i: (0, 0)),      # b1 (f32)
            pl.BlockSpec((H_pad, H_pad), lambda i: (0, 0)),  # w2
            pl.BlockSpec((1, H_pad), lambda i: (0, 0)),      # b2
            pl.BlockSpec((H_pad, C), lambda i: (0, 0)),      # w3 (true class width)
            pl.BlockSpec((1, C), lambda i: (0, 0)),          # b3
        ],
        out_specs=pl.BlockSpec((TB, C), lambda i: (i, 0)),
        compiler_params=pltpu.CompilerParams(
            dimension_semantics=("parallel",),
        ),
        cost_estimate=cost,
    )(x, w1, b1, w2, b2, w3, b3)

    return out[:B] if B_pad != B else out


def init_params(key, input_size, hidden_size, num_classes):
    """Real-shape f32 params; weights stored as [in, out] (transposed vs. PyTorch)."""
    k1, k2, k3, k4, k5, k6 = jax.random.split(key, 6)

    def uniform_init(k, shape, fan_in):
        bound = 1.0 / jnp.sqrt(fan_in)
        return jax.random.uniform(k, shape, jnp.float32, -bound, bound)

    return {
        "w1": uniform_init(k1, (input_size, hidden_size), input_size),
        "b1": uniform_init(k2, (1, hidden_size), input_size),
        "w2": uniform_init(k3, (hidden_size, hidden_size), hidden_size),
        "b2": uniform_init(k4, (1, hidden_size), hidden_size),
        "w3": uniform_init(k5, (hidden_size, num_classes), hidden_size),
        "b3": uniform_init(k6, (1, num_classes), hidden_size),
    }


def prep_params(params):
    """Zero-pad only the hidden dim to a lane multiple (128); weights -> bf16
    ([in, out]), biases -> f32 ([1, out]).  Input and class dims keep true widths."""
    IN, H = params["w1"].shape
    C = params["w3"].shape[1]
    Hp = _round_up(H, 128)

    def pad_w(w, rows, cols):
        wp = jnp.zeros((rows, cols), jnp.bfloat16)
        return wp.at[: w.shape[0], : w.shape[1]].set(w.astype(jnp.bfloat16))

    def pad_b(b, cols):
        bp = jnp.zeros((1, cols), jnp.float32)
        return bp.at[:, : b.shape[-1]].set(b.reshape(1, -1))

    return {
        "w1": pad_w(params["w1"], IN, Hp), "b1": pad_b(params["b1"], Hp),
        "w2": pad_w(params["w2"], Hp, Hp), "b2": pad_b(params["b2"], Hp),
        "w3": pad_w(params["w3"], Hp, C), "b3": pad_b(params["b3"], C),
    }


if __name__ == "__main__":
    # Small shapes consistent with the module: bag-of-words input -> hidden=8 -> classes.
    batch = 4
    input_size = 32   # len(all_words) stand-in
    hidden_size = 8
    num_classes = 5   # number of intents stand-in

    key = jax.random.PRNGKey(0)
    kx, kp = jax.random.split(key)
    x = jax.random.uniform(kx, (batch, input_size), jnp.float32)  # bag-of-words-like input
    params = init_params(kp, input_size, hidden_size, num_classes)
    prepped = prep_params(params)

    fwd = jax.jit(functools.partial(neural_net_forward, num_classes=num_classes))
    out = jax.block_until_ready(fwd(x, prepped))

    # Reference in plain JAX with the same precision recipe (bf16 operands, f32 acc).
    def bf(w):
        return w.astype(jnp.bfloat16).astype(jnp.float32)

    h1 = jnp.maximum(bf(x) @ bf(params["w1"]) + params["b1"], 0.0)
    h2 = jnp.maximum(bf(h1) @ bf(params["w2"]) + params["b2"], 0.0)
    ref = bf(h2) @ bf(params["w3"]) + params["b3"]

    assert out.shape == (batch, num_classes)
    assert jnp.allclose(out, ref, atol=2e-2, rtol=2e-2), "mismatch vs reference"

    print("KERNEL_OK")
</pallas_src>

<mosaic_0001>
module attributes {stable_mosaic.version = 11 : i64} {
  func.func @mlp_kernel(%arg0: i32, %arg1: memref<4x32xf32, #tpu.memory_space<vmem>>, %arg2: memref<32x128xbf16, #tpu.memory_space<vmem>>, %arg3: memref<1x128xf32, #tpu.memory_space<vmem>>, %arg4: memref<128x128xbf16, #tpu.memory_space<vmem>>, %arg5: memref<1x128xf32, #tpu.memory_space<vmem>>, %arg6: memref<128x5xbf16, #tpu.memory_space<vmem>>, %arg7: memref<1x5xf32, #tpu.memory_space<vmem>>, %arg8: memref<4x5xf32, #tpu.memory_space<vmem>>) attributes {dimension_semantics = [#tpu.dimension_semantics<parallel>], iteration_bounds = array<i64: 1>, scalar_prefetch = 0 : i64, scratch_operands = 0 : i64, tpu.core_type = #tpu.core_type<tc>, window_params = [{transform_indices = @transform_0, window_bounds = array<i64: 4, 32>}, {pipeline_mode = #tpu.pipeline_mode<synchronous>, transform_indices = @transform_1, window_bounds = array<i64: 32, 128>}, {pipeline_mode = #tpu.pipeline_mode<synchronous>, transform_indices = @transform_2, window_bounds = array<i64: 1, 128>}, {pipeline_mode = #tpu.pipeline_mode<synchronous>, transform_indices = @transform_3, window_bounds = array<i64: 128, 128>}, {pipeline_mode = #tpu.pipeline_mode<synchronous>, transform_indices = @transform_4, window_bounds = array<i64: 1, 128>}, {pipeline_mode = #tpu.pipeline_mode<synchronous>, transform_indices = @transform_5, window_bounds = array<i64: 128, 5>}, {pipeline_mode = #tpu.pipeline_mode<synchronous>, transform_indices = @transform_6, window_bounds = array<i64: 1, 5>}, {transform_indices = @transform_7, window_bounds = array<i64: 4, 5>}]} {
    %c0 = arith.constant 0 : index
    %c0_0 = arith.constant 0 : index
    %0 = vector.load %arg1[%c0, %c0_0] : memref<4x32xf32, #tpu.memory_space<vmem>>, vector<4x32xf32>
    %1 = arith.truncf %0 : vector<4x32xf32> to vector<4x32xbf16>
    %c0_1 = arith.constant 0 : index
    %c0_2 = arith.constant 0 : index
    %2 = vector.load %arg3[%c0_1, %c0_2] : memref<1x128xf32, #tpu.memory_space<vmem>>, vector<1x128xf32>
    %c0_3 = arith.constant 0 : index
    %c0_4 = arith.constant 0 : index
    %3 = vector.load %arg5[%c0_3, %c0_4] : memref<1x128xf32, #tpu.memory_space<vmem>>, vector<1x128xf32>
    %c0_5 = arith.constant 0 : index
    %c0_6 = arith.constant 0 : index
    %4 = vector.load %arg7[%c0_5, %c0_6] : memref<1x5xf32, #tpu.memory_space<vmem>>, vector<1x5xf32>
    %c0_7 = arith.constant 0 : index
    %c0_8 = arith.constant 0 : index
    %5 = vector.load %arg2[%c0_7, %c0_8] : memref<32x128xbf16, #tpu.memory_space<vmem>>, vector<32x128xbf16>
    %cst = arith.constant dense<0.000000e+00> : vector<4x128xf32>
    %6 = tpu.matmul %1, %5, %cst {dimension_numbers = #tpu.dot_dimension_numbers<[1], [0], [0], [1], [0, 0, 1, 1], [], []>} : vector<4x32xbf16>, vector<32x128xbf16>, vector<4x128xf32> -> vector<4x128xf32>
    %7 = vector.broadcast %2 : vector<1x128xf32> to vector<4x128xf32>
    %8 = arith.addf %6, %7 : vector<4x128xf32>
    %cst_9 = arith.constant 0.000000e+00 : f32
    %9 = vector.broadcast %cst_9 : f32 to vector<4x128xf32>
    %10 = arith.maximumf %8, %9 : vector<4x128xf32>
    %11 = arith.truncf %10 : vector<4x128xf32> to vector<4x128xbf16>
    %c0_10 = arith.constant 0 : index
    %c0_11 = arith.constant 0 : index
    %12 = vector.load %arg4[%c0_10, %c0_11] : memref<128x128xbf16, #tpu.memory_space<vmem>>, vector<128x128xbf16>
    %cst_12 = arith.constant dense<0.000000e+00> : vector<4x128xf32>
    %13 = tpu.matmul %11, %12, %cst_12 {dimension_numbers = #tpu.dot_dimension_numbers<[1], [0], [0], [1], [0, 0, 1, 1], [], []>} : vector<4x128xbf16>, vector<128x128xbf16>, vector<4x128xf32> -> vector<4x128xf32>
    %14 = vector.broadcast %3 : vector<1x128xf32> to vector<4x128xf32>
    %15 = arith.addf %13, %14 : vector<4x128xf32>
    %cst_13 = arith.constant 0.000000e+00 : f32
    %16 = vector.broadcast %cst_13 : f32 to vector<4x128xf32>
    %17 = arith.maximumf %15, %16 : vector<4x128xf32>
    %18 = arith.truncf %17 : vector<4x128xf32> to vector<4x128xbf16>
    %c0_14 = arith.constant 0 : index
    %c0_15 = arith.constant 0 : index
    %19 = vector.load %arg6[%c0_14, %c0_15] : memref<128x5xbf16, #tpu.memory_space<vmem>>, vector<128x5xbf16>
    %cst_16 = arith.constant dense<0.000000e+00> : vector<4x5xf32>
    %20 = tpu.matmul %18, %19, %cst_16 {dimension_numbers = #tpu.dot_dimension_numbers<[1], [0], [0], [1], [0, 0, 1, 1], [], []>} : vector<4x128xbf16>, vector<128x5xbf16>, vector<4x5xf32> -> vector<4x5xf32>
    %21 = vector.broadcast %4 : vector<1x5xf32> to vector<4x5xf32>
    %22 = arith.addf %20, %21 : vector<4x5xf32>
    %c0_17 = arith.constant 0 : index
    %c0_18 = arith.constant 0 : index
    %23 = vector.load %arg8[%c0_17, %c0_18] : memref<4x5xf32, #tpu.memory_space<vmem>>, vector<4x5xf32>
    tpu.vector_store %arg8[%c0_17, %c0_18], %22 {strides = array<i32>} : memref<4x5xf32, #tpu.memory_space<vmem>>, vector<4x5xf32>,
    return
  }
  func.func @transform_0(%arg0: i32) -> (i32, i32) {
    %c0_i32 = arith.constant 0 : i32
    %c0_i32_0 = arith.constant 0 : i32
    return %arg0, %c0_i32 : i32, i32
  }
  func.func @transform_1(%arg0: i32) -> (i32, i32) {
    %c0_i32 = arith.constant 0 : i32
    %c0_i32_0 = arith.constant 0 : i32
    %c0_i32_1 = arith.constant 0 : i32
    return %c0_i32, %c0_i32_0 : i32, i32
  }
  func.func @transform_2(%arg0: i32) -> (i32, i32) {
    %c0_i32 = arith.constant 0 : i32
    %c0_i32_0 = arith.constant 0 : i32
    %c0_i32_1 = arith.constant 0 : i32
    return %c0_i32, %c0_i32_0 : i32, i32
  }
  func.func @transform_3(%arg0: i32) -> (i32, i32) {
    %c0_i32 = arith.constant 0 : i32
    %c0_i32_0 = arith.constant 0 : i32
    %c0_i32_1 = arith.constant 0 : i32
    return %c0_i32, %c0_i32_0 : i32, i32
  }
  func.func @transform_4(%arg0: i32) -> (i32, i32) {
    %c0_i32 = arith.constant 0 : i32
    %c0_i32_0 = arith.constant 0 : i32
    %c0_i32_1 = arith.constant 0 : i32
    return %c0_i32, %c0_i32_0 : i32, i32
  }
  func.func @transform_5(%arg0: i32) -> (i32, i32) {
    %c0_i32 = arith.constant 0 : i32
    %c0_i32_0 = arith.constant 0 : i32
    %c0_i32_1 = arith.constant 0 : i32
    return %c0_i32, %c0_i32_0 : i32, i32
  }
  func.func @transform_6(%arg0: i32) -> (i32, i32) {
    %c0_i32 = arith.constant 0 : i32
    %c0_i32_0 = arith.constant 0 : i32
    %c0_i32_1 = arith.constant 0 : i32
    return %c0_i32, %c0_i32_0 : i32, i32
  }
  func.func @transform_7(%arg0: i32) -> (i32, i32) {
    %c0_i32 = arith.constant 0 : i32
    %c0_i32_0 = arith.constant 0 : i32
    return %arg0, %c0_i32 : i32, i32
  }
}

</mosaic_0001>

<llo_original>
// kernel: neural_net_forward.1
$region0: #{neural_net_forward.1}
  #allocation0 [shape = 'u32[]', space=smem, size = 0x4, offset = 0x4, fixed_abs, tag = 'smem constant byte address 0x4 - core index']
  #allocation1 [shape = 'u32[144,128]{1,0:T(1,128)}', space=vmem, size = 0x12000, scoped, tag = 'internal scratch']
  %s0 = inlined_call_operand.vmem [shape: f32[4,32], index: 0, kind: input, shape index: {}]
  %s1 = inlined_call_operand.vmem [shape: bf16[32,128], index: 1, kind: input, shape index: {}]
  %s2 = inlined_call_operand.vmem [shape: f32[1,128], index: 2, kind: input, shape index: {}]
  %s3 = inlined_call_operand.vmem [shape: bf16[128,128], index: 3, kind: input, shape index: {}]
  %s4 = inlined_call_operand.vmem [shape: f32[1,128], index: 4, kind: input, shape index: {}]
  %s5 = inlined_call_operand.vmem [shape: bf16[128,5], index: 5, kind: input, shape index: {}]
  %s6 = inlined_call_operand.hbm [shape: f32[1,5], index: 6, kind: input, shape index: {}]
  %s7 = inlined_call_operand.hbm [shape: f32[4,5], index: 7, kind: output, shape index: {}]
  %s8 = sld [smem:[#allocation0]]
  $region42: #{neural_net_forward.1} parent=0
    _
  %s10 = ssub.s32 1, %s8
  %s11 = scalar_select 0, %s10, %s8
  $region1: #{neural_net_forward.1} parent=0
    #allocation2 [shape = 'u8[512]{0}', space=vmem, size = 0x400, scoped, tag = 'input window, operand 6, single buffered']
    #allocation3 [shape = 's32[1]{0}', space=sflag, size = 0x4, scoped, tag = 'scoped memory for neural_net_forward.1']
    #allocation4 [shape = 's32[1]{0}', space=sflag, size = 0x4, scoped, tag = 'scoped memory for neural_net_forward.1']
    #allocation5 [shape = 'u8[2048]{0}', space=vmem, size = 0x800, scoped, tag = 'output window, operand 0, single buffered']
    %12 = vsyncpa [#allocation3], 0
    %13 = vsyncpa [#allocation4], 0
    // Predicated region
    $region2: #{neural_net_forward.1} parent=1 // pred_check
      _
    $region3: #{neural_net_forward.1} parent=1 // pred_check_branch
      %15 = sbr.rel (0) target = $region5
    $region4: #{neural_net_forward.1} parent=1 // pred_region
      _
    $region5: #{neural_net_forward.1} parent=1 // pred_fallthru
      _
    // Predicated region
    $region6: #{neural_net_forward.1} parent=1 // pred_check
      _
    $region7: #{neural_net_forward.1} parent=1 // pred_check_branch
      %17 = sbr.rel (0) target = $region9
    $region8: #{neural_net_forward.1} parent=1 // pred_region
      _
    $region9: #{neural_net_forward.1} parent=1 // pred_fallthru
      _
    // Predicated region
    $region10: #{neural_net_forward.1} parent=1 // pred_check
      _
    $region11: #{neural_net_forward.1} parent=1 // pred_check_branch
      %19 = sbr.rel (0) target = $region13
    $region12: #{neural_net_forward.1} parent=1 // pred_region
      _
    $region13: #{neural_net_forward.1} parent=1 // pred_fallthru
      _
    // Predicated region
    $region14: #{neural_net_forward.1} parent=1 // pred_check
      _
    $region15: #{neural_net_forward.1} parent=1 // pred_check_branch
      %21 = sbr.rel (0) target = $region17
    $region16: #{neural_net_forward.1} parent=1 // pred_region
      _
    $region17: #{neural_net_forward.1} parent=1 // pred_fallthru
      _
    // Predicated region
    $region18: #{neural_net_forward.1} parent=1 // pred_check
      _
    $region19: #{neural_net_forward.1} parent=1 // pred_check_branch
      %23 = sbr.rel (0) target = $region21
    $region20: #{neural_net_forward.1} parent=1 // pred_region
      _
    $region21: #{neural_net_forward.1} parent=1 // pred_fallthru
      _
    // Predicated region
    $region22: #{neural_net_forward.1} parent=1 // pred_check
      _
    $region23: #{neural_net_forward.1} parent=1 // pred_check_branch
      %25 = sbr.rel (0) target = $region25
    $region24: #{neural_net_forward.1} parent=1 // pred_region
      _
    $region25: #{neural_net_forward.1} parent=1 // pred_fallthru
      _
    // Predicated region
    $region26: #{neural_net_forward.1} parent=1 // pred_check
      _
    $region27: #{neural_net_forward.1} parent=1 // pred_check_branch
      %27 = sbr.rel (0) target = $region29
    $region28: #{neural_net_forward.1} parent=1 // pred_region
      %s29 = ssub.s32 16, 16
      %30 = vsyncadd [#allocation3], %s29
      %s32 = sshll.u32 [#allocation2], 4
      %s33 = int_to_ptr.vmem [resolvable:$true] %s32
      %35 = dma.hbm_to_vmem [thread:$0]  %s6, 16, %s33, [#allocation3]
    $region29: #{neural_net_forward.1} parent=1 // pred_fallthru
      _
    // Predicated region
    $region30: #{neural_net_forward.1} parent=1 // pred_check
      _
    $region31: #{neural_net_forward.1} parent=1 // pred_check_branch
      %37 = sbr.rel (0) target = $region33
    $region32: #{neural_net_forward.1} parent=1 // pred_region
      %38 = dma.done [#allocation3], 16
    $region33: #{neural_net_forward.1} parent=1 // pred_fallthru
      _
    %v40 = vld [vmem:[%s0] sm:$0xf]
    %v41 = vpack.c.bf16 %v40, %v40
    %v42 = vld [vmem:[%s2] sm:$0x1]
    %v43 = vld [vmem:[%s4] sm:$0x1]
    %v44 = vld [vmem:[#allocation2] sm:$0x1]
    %v45 = vld [vmem:[%s1] sm:$0xf]
    %v46 = vld [vmem:[%s1 + $0x4] sm:$0xf]
    %v47 = vld [vmem:[%s1 + $0x8] sm:$0xf]
    %v48 = vld [vmem:[%s1 + $0xc] sm:$0xf]
    %v50 = vlaneseq
    %v51 = vshrl.u32 %v50, 7
    %v52 = vsub.s32 0, %v51
    %v53 = vrot.slane %v42, %v52
    %v59 = vunpack.c.l.b16 %v45
    %v60 = vunpack.c.l.b16 %v46
    %v61 = vunpack.c.l.b16 %v47
    %v62 = vunpack.c.l.b16 %v48
    %v63 = vpack.c.b16 %v60, %v59
    %v64 = vpack.c.b16 %v62, %v61
    %vm67 = vcmask 261120
    %v69 = vsel %vm67, %v41, 0
    %71 = vmatprep.subr.bf16.mxu0 0
    %72 = vmatpush1.bf16.msra.mxu0 %v63
    %73 = vmatprep.subr.bf16.mxu0 0
    %74 = vmatpush1.bf16.msra.mxu0 %v64
    %75 = vmatprep.subr.bf16.mxu0 0
    %76 = vmatpush1.bf16.msra.mxu0 0
    %77 = vmatprep.subr.bf16.mxu0 0
    %78 = vmatpush1.bf16.msra.mxu0 0
    %79 = vmatprep.subr.bf16.mxu0 0
    %80 = vmatpush1.bf16.msra.mxu0 0
    %81 = vmatprep.subr.bf16.mxu0 0
    %82 = vmatpush1.bf16.msra.mxu0 0
    %83 = vmatprep.subr.bf16.mxu0 0
    %84 = vmatpush1.bf16.msra.mxu0 0
    %85 = vmatprep.subr.bf16.mxu0 0
    %86 = vmatpush1.bf16.msra.mxu0 0
    %87 = vmatprep.subr.bf16.mxu0 0
    %88 = vmatpush1.bf16.msra.mxu0 0
    %89 = vmatprep.subr.bf16.mxu0 0
    %90 = vmatpush1.bf16.msra.mxu0 0
    %91 = vmatprep.subr.bf16.mxu0 0
    %92 = vmatpush1.bf16.msra.mxu0 0
    %93 = vmatprep.subr.bf16.mxu0 0
    %94 = vmatpush1.bf16.msra.mxu0 0
    %95 = vmatprep.subr.bf16.mxu0 0
    %96 = vmatpush1.bf16.msra.mxu0 0
    %97 = vmatprep.subr.bf16.mxu0 0
    %98 = vmatpush1.bf16.msra.mxu0 0
    %99 = vmatprep.subr.bf16.mxu0 0
    %100 = vmatpush1.bf16.msra.mxu0 0
    %101 = vmatprep.subr.bf16.mxu0 0
    %102 = vmatpush1.bf16.msra.mxu0 0
    %103 = vmatprep.mubr.bf16.mxu0 0
    %104 = vmatmul.mubr.bf16.gmra.mrb[0].mxu0 %v69
    %v105 = vpop.f32.mrb[0].mxu0
    %v106 = vadd.f32 %v53, %v105
    %v107 = vpop.f32.mrb[0].mxu0
    %v108 = vpop.f32.mrb[0].mxu0
    %v109 = vpop.f32.mrb[0].mxu0
    %110 = vdwg.mxu0
    %v111 = vmax.f32 %v106, 0.0
    %v112 = vpack.c.bf16 %v111, %v111
    %v113 = vld [vmem:[%s3] sm:$0xf]
    %v114 = vld [vmem:[%s3 + $0x4] sm:$0xf]
    %v115 = vld [vmem:[%s3 + $0x8] sm:$0xf]
    %v116 = vld [vmem:[%s3 + $0xc] sm:$0xf]
    %v117 = vld [vmem:[%s3 + $0x10] sm:$0xf]
    %v118 = vld [vmem:[%s3 + $0x14] sm:$0xf]
    %v119 = vld [vmem:[%s3 + $0x18] sm:$0xf]
    %v120 = vld [vmem:[%s3 + $0x1c] sm:$0xf]
    %v121 = vld [vmem:[%s3 + $0x20] sm:$0xf]
    %v122 = vld [vmem:[%s3 + $0x24] sm:$0xf]
    %v123 = vld [vmem:[%s3 + $0x28] sm:$0xf]
    %v124 = vld [vmem:[%s3 + $0x2c] sm:$0xf]
    %v125 = vld [vmem:[%s3 + $0x30] sm:$0xf]
    %v126 = vld [vmem:[%s3 + $0x34] sm:$0xf]
    %v127 = vld [vmem:[%s3 + $0x38] sm:$0xf]
    %v128 = vld [vmem:[%s3 + $0x3c] sm:$0xf]
    %v130 = vlaneseq
    %v131 = vshrl.u32 %v130, 7
    %v132 = vsub.s32 0, %v131
    %v133 = vrot.slane %v43, %v132
    %v151 = vunpack.c.l.b16 %v113
    %v152 = vunpack.c.l.b16 %v114
    %v153 = vunpack.c.l.b16 %v115
    %v154 = vunpack.c.l.b16 %v116
    %v155 = vunpack.c.l.b16 %v117
    %v156 = vunpack.c.l.b16 %v118
    %v157 = vunpack.c.l.b16 %v119
    %v158 = vunpack.c.l.b16 %v120
    %v159 = vunpack.c.l.b16 %v121
    %v160 = vunpack.c.l.b16 %v122
    %v161 = vunpack.c.l.b16 %v123
    %v162 = vunpack.c.l.b16 %v124
    %v163 = vunpack.c.l.b16 %v125
    %v164 = vunpack.c.l.b16 %v126
    %v165 = vunpack.c.l.b16 %v127
    %v166 = vunpack.c.l.b16 %v128
    %v167 = vpack.c.b16 %v152, %v151
    %v168 = vpack.c.b16 %v154, %v153
    %v169 = vpack.c.b16 %v156, %v155
    %v170 = vpack.c.b16 %v158, %v157
    %v171 = vpack.c.b16 %v160, %v159
    %v172 = vpack.c.b16 %v162, %v161
    %v173 = vpack.c.b16 %v164, %v163
    %v174 = vpack.c.b16 %v166, %v165
    %183 = vmatprep.subr.bf16.mxu0 0
    %184 = vmatpush1.bf16.msra.mxu0 %v167
    %185 = vmatprep.subr.bf16.mxu0 0
    %186 = vmatpush1.bf16.msra.mxu0 %v168
    %187 = vmatprep.subr.bf16.mxu0 0
    %188 = vmatpush1.bf16.msra.mxu0 %v169
    %189 = vmatprep.subr.bf16.mxu0 0
    %190 = vmatpush1.bf16.msra.mxu0 %v170
    %191 = vmatprep.subr.bf16.mxu0 0
    %192 = vmatpush1.bf16.msra.mxu0 %v171
    %193 = vmatprep.subr.bf16.mxu0 0
    %194 = vmatpush1.bf16.msra.mxu0 %v172
    %195 = vmatprep.subr.bf16.mxu0 0
    %196 = vmatpush1.bf16.msra.mxu0 %v173
    %197 = vmatprep.subr.bf16.mxu0 0
    %198 = vmatpush1.bf16.msra.mxu0 %v174
    %199 = vmatprep.subr.bf16.mxu0 0
    %200 = vmatpush1.bf16.msra.mxu0 0
    %201 = vmatprep.subr.bf16.mxu0 0
    %202 = vmatpush1.bf16.msra.mxu0 0
    %203 = vmatprep.subr.bf16.mxu0 0
    %204 = vmatpush1.bf16.msra.mxu0 0
    %205 = vmatprep.subr.bf16.mxu0 0
    %206 = vmatpush1.bf16.msra.mxu0 0
    %207 = vmatprep.subr.bf16.mxu0 0
    %208 = vmatpush1.bf16.msra.mxu0 0
    %209 = vmatprep.subr.bf16.mxu0 0
    %210 = vmatpush1.bf16.msra.mxu0 0
    %211 = vmatprep.subr.bf16.mxu0 0
    %212 = vmatpush1.bf16.msra.mxu0 0
    %213 = vmatprep.subr.bf16.mxu0 0
    %214 = vmatpush1.bf16.msra.mxu0 0
    %215 = vmatprep.mubr.bf16.mxu0 0
    %216 = vmatmul.mubr.bf16.gmra.mrb[0].mxu0 %v112
    %v217 = vpop.f32.mrb[0].mxu0
    %v218 = vadd.f32 %v133, %v217
    %v219 = vpop.f32.mrb[0].mxu0
    %v220 = vpop.f32.mrb[0].mxu0
    %v221 = vpop.f32.mrb[0].mxu0
    %222 = vdwg.mxu0
    %v223 = vmax.f32 %v218, 0.0
    %v224 = vpack.c.bf16 %v223, %v223
    %v225 = vld [vmem:[%s5] sm:$0xf]
    %v226 = vld [vmem:[%s5 + $0x4] sm:$0xf]
    %v227 = vld [vmem:[%s5 + $0x8] sm:$0xf]
    %v228 = vld [vmem:[%s5 + $0xc] sm:$0xf]
    %v229 = vld [vmem:[%s5 + $0x10] sm:$0xf]
    %v230 = vld [vmem:[%s5 + $0x14] sm:$0xf]
    %v231 = vld [vmem:[%s5 + $0x18] sm:$0xf]
    %v232 = vld [vmem:[%s5 + $0x1c] sm:$0xf]
    %v233 = vld [vmem:[%s5 + $0x20] sm:$0xf]
    %v234 = vld [vmem:[%s5 + $0x24] sm:$0xf]
    %v235 = vld [vmem:[%s5 + $0x28] sm:$0xf]
    %v236 = vld [vmem:[%s5 + $0x2c] sm:$0xf]
    %v237 = vld [vmem:[%s5 + $0x30] sm:$0xf]
    %v238 = vld [vmem:[%s5 + $0x34] sm:$0xf]
    %v239 = vld [vmem:[%s5 + $0x38] sm:$0xf]
    %v240 = vld [vmem:[%s5 + $0x3c] sm:$0xf]
    %v242 = vlaneseq
    %v243 = vshrl.u32 %v242, 7
    %v244 = vsub.s32 0, %v243
    %v245 = vrot.slane %v44, %v244
    %v263 = vunpack.c.l.b16 %v225
    %v264 = vunpack.c.l.b16 %v226
    %v265 = vunpack.c.l.b16 %v227
    %v266 = vunpack.c.l.b16 %v228
    %v267 = vunpack.c.l.b16 %v229
    %v268 = vunpack.c.l.b16 %v230
    %v269 = vunpack.c.l.b16 %v231
    %v270 = vunpack.c.l.b16 %v232
    %v271 = vunpack.c.l.b16 %v233
    %v272 = vunpack.c.l.b16 %v234
    %v273 = vunpack.c.l.b16 %v235
    %v274 = vunpack.c.l.b16 %v236
    %v275 = vunpack.c.l.b16 %v237
    %v276 = vunpack.c.l.b16 %v238
    %v277 = vunpack.c.l.b16 %v239
    %v278 = vunpack.c.l.b16 %v240
    %v279 = vpack.c.b16 %v264, %v263
    %v280 = vpack.c.b16 %v266, %v265
    %v281 = vpack.c.b16 %v268, %v267
    %v282 = vpack.c.b16 %v270, %v269
    %v283 = vpack.c.b16 %v272, %v271
    %v284 = vpack.c.b16 %v274, %v273
    %v285 = vpack.c.b16 %v276, %v275
    %v286 = vpack.c.b16 %v278, %v277
    %295 = vmatprep.subr.bf16.mxu0 0
    %296 = vmatpush1.bf16.msra.mxu0 %v279
    %297 = vmatprep.subr.bf16.mxu0 0
    %298 = vmatpush1.bf16.msra.mxu0 %v280
    %299 = vmatprep.subr.bf16.mxu0 0
    %300 = vmatpush1.bf16.msra.mxu0 %v281
    %301 = vmatprep.subr.bf16.mxu0 0
    %302 = vmatpush1.bf16.msra.mxu0 %v282
    %303 = vmatprep.subr.bf16.mxu0 0
    %304 = vmatpush1.bf16.msra.mxu0 %v283
    %305 = vmatprep.subr.bf16.mxu0 0
    %306 = vmatpush1.bf16.msra.mxu0 %v284
    %307 = vmatprep.subr.bf16.mxu0 0
    %308 = vmatpush1.bf16.msra.mxu0 %v285
    %309 = vmatprep.subr.bf16.mxu0 0
    %310 = vmatpush1.bf16.msra.mxu0 %v286
    %311 = vmatprep.subr.bf16.mxu0 0
    %312 = vmatpush1.bf16.msra.mxu0 0
    %313 = vmatprep.subr.bf16.mxu0 0
    %314 = vmatpush1.bf16.msra.mxu0 0
    %315 = vmatprep.subr.bf16.mxu0 0
    %316 = vmatpush1.bf16.msra.mxu0 0
    %317 = vmatprep.subr.bf16.mxu0 0
    %318 = vmatpush1.bf16.msra.mxu0 0
    %319 = vmatprep.subr.bf16.mxu0 0
    %320 = vmatpush1.bf16.msra.mxu0 0
    %321 = vmatprep.subr.bf16.mxu0 0
    %322 = vmatpush1.bf16.msra.mxu0 0
    %323 = vmatprep.subr.bf16.mxu0 0
    %324 = vmatpush1.bf16.msra.mxu0 0
    %325 = vmatprep.subr.bf16.mxu0 0
    %326 = vmatpush1.bf16.msra.mxu0 0
    %327 = vmatprep.mubr.bf16.mxu0 0
    %328 = vmatmul.mubr.bf16.gmra.mrb[0].mxu0 %v224
    %v329 = vpop.f32.mrb[0].mxu0
    %v330 = vadd.f32 %v245, %v329
    %v331 = vpop.f32.mrb[0].mxu0
    %v332 = vpop.f32.mrb[0].mxu0
    %v333 = vpop.f32.mrb[0].mxu0
    %334 = vdwg.mxu0
    %vm335 = vcmask 35840
    %336 = vst.msk [vmem:[#allocation5] sm:$0xf] %vm335, %v330
    // Predicated region
    $region34: #{neural_net_forward.1} parent=1 // pred_check
      _
    $region35: #{neural_net_forward.1} parent=1 // pred_check_branch
      %338 = sbr.rel (0) target = $region37
    $region36: #{neural_net_forward.1} parent=1 // pred_region
      %s340 = ssub.s32 64, 64
      %341 = vsyncadd [#allocation4], %s340
      %s343 = sshll.u32 [#allocation5], 4
      %s344 = int_to_ptr.vmem [resolvable:$true] %s343
      %346 = dma.vmem_to_hbm [thread:$0]  %s344, 64, %s7, [#allocation4]
    $region37: #{neural_net_forward.1} parent=1 // pred_fallthru
      _
    // Predicated region
    $region38: #{neural_net_forward.1} parent=1 // pred_check
      _
    $region39: #{neural_net_forward.1} parent=1 // pred_check_branch
      %348 = sbr.rel (0) target = $region41
    $region40: #{neural_net_forward.1} parent=1 // pred_region
      %349 = dma.done [#allocation4], 64
    $region41: #{neural_net_forward.1} parent=1 // pred_fallthru
      _
    %350 = vsyncpa [#allocation3], 1
    %351 = vsyncpa [#allocation4], 1

</llo_original>
